<compile_context>
chip_gen: v6e
topology: v6e:2x2x1
jax: 0.10.0
libtpu: 0.0.40
codegen_flags: <defaults>
</compile_context>

<pallas_src>
import functools

import jax
import jax.numpy as jnp
from jax.experimental import pallas as pl
from jax.experimental.pallas import tpu as pltpu


# ---------------------------------------------------------------------------
# Kernel: T-step GRU encoder, weights resident in VMEM, hidden carried in scratch
# ---------------------------------------------------------------------------
def gru_seq_kernel(h0_ref, x_ref, wrz_ref, win_ref, whn_ref,
                   brz_ref, bin_ref, bhn_ref, out_ref, h_sc,
                   *, n_layers, hidden_size):
    """One grid step == one EncoderRNN.forward() call (one token).

    h0_ref  : (B, H)        initial hidden (read only at t == 0)
    x_ref   : (1, B, IN)    this step's input row block ("embedded")
    wrz_ref : (IN+H, 2H)    bf16, stacked [W_ir^T; W_hr^T | W_iz^T; W_hz^T] blocks [r|z]
    win_ref : (IN, H)       bf16, W_in^T
    whn_ref : (H, H)        bf16, W_hn^T
    brz_ref : (1, 2H)       f32, folded b_i{r,z} + b_h{r,z}
    bin_ref : (1, H)        f32, b_in
    bhn_ref : (1, H)        f32, b_hn
    out_ref : (1, B, H)     this step's output (== new hidden)
    h_sc    : (B, H)        f32 VMEM scratch carrying the hidden across steps
    """
    H = hidden_size
    t = pl.program_id(0)

    @pl.when(t == 0)
    def _():
        h_sc[...] = h0_ref[...]

    # Weights/biases: constant index_maps -> fetched into VMEM once, reused by
    # every grid step and every unrolled layer.
    wrz = wrz_ref[...]
    win = win_ref[...]
    whn = whn_ref[...]
    brz = brz_ref[...]
    b_in = bin_ref[...]
    b_hn = bhn_ref[...]

    def gru_cell(x, h):
        # r/z gates: K-depth-fused single MXU matmul, K = IN + H.
        xh = jnp.concatenate([x, h], axis=-1).astype(wrz.dtype)      # (B, IN+H) bf16
        grz = jnp.dot(xh, wrz, preferred_element_type=jnp.float32) + brz   # (B, 2H) f32
        r = jax.nn.sigmoid(grz[:, 0:H])
        z = jax.nn.sigmoid(grz[:, H:2 * H])
        # n gate: gi_n and gh_n must stay separate (PyTorch: n = tanh(gi_n + r*gh_n)).
        gin = jnp.dot(x.astype(win.dtype), win,
                      preferred_element_type=jnp.float32) + b_in     # (B, H) f32
        ghn = jnp.dot(h.astype(whn.dtype), whn,
                      preferred_element_type=jnp.float32) + b_hn     # (B, H) f32
        n = jnp.tanh(gin + r * ghn)
        return (1.0 - z) * n + z * h

    x = x_ref[0]           # (B, IN) f32
    h = h_sc[...]          # (B, H)  f32

    # Layer 0: gru(embedded, hidden); layers 1..n-1: output == hidden, so (h, h).
    h = gru_cell(x, h)
    for _ in range(n_layers - 1):          # statically unrolled (n_layers small)
        h = gru_cell(h, h)

    h_sc[...] = h
    out_ref[0] = h.astype(out_ref.dtype)


# ---------------------------------------------------------------------------
# Wrappers
# ---------------------------------------------------------------------------
def encoder_gru_sequence(x_seq, h0, kparams, n_layers=1):
    """Runs T chained EncoderRNN.forward() steps in a single pallas_call.

    x_seq: (T, B, IN) f32, h0: (B, H) f32
    returns (out_seq (T, B, H) f32, h_final (B, H) f32)
    """
    T, B, IN = x_seq.shape
    H = h0.shape[-1]
    if n_layers > 1:
        # Same restriction as the PyTorch original: the single nn.GRU is reused
        # every layer, so its input size must equal its hidden size.
        assert IN == H, "n_layers > 1 requires input_size == hidden_size"

    out_seq = pl.pallas_call(
        functools.partial(gru_seq_kernel, n_layers=n_layers, hidden_size=H),
        out_shape=jax.ShapeDtypeStruct((T, B, H), jnp.float32),
        grid=(T,),
        in_specs=[
            pl.BlockSpec((B, H), lambda t: (0, 0)),            # h0 (resident)
            pl.BlockSpec((1, B, IN), lambda t: (t, 0, 0)),      # x streamed per step
            pl.BlockSpec((IN + H, 2 * H), lambda t: (0, 0)),    # W_rz (resident)
            pl.BlockSpec((IN, H), lambda t: (0, 0)),            # W_in (resident)
            pl.BlockSpec((H, H), lambda t: (0, 0)),             # W_hn (resident)
            pl.BlockSpec((1, 2 * H), lambda t: (0, 0)),         # b_rz
            pl.BlockSpec((1, H), lambda t: (0, 0)),             # b_in
            pl.BlockSpec((1, H), lambda t: (0, 0)),             # b_hn
        ],
        out_specs=pl.BlockSpec((1, B, H), lambda t: (t, 0, 0)),
        scratch_shapes=[pltpu.VMEM((B, H), jnp.float32)],       # hidden carry
        compiler_params=pltpu.CompilerParams(
            dimension_semantics=("arbitrary",),                 # sequential carry over T
            vmem_limit_bytes=16 * 1024 * 1024,
        ),
    )(h0, x_seq,
      kparams["w_rz"], kparams["w_in"], kparams["w_hn"],
      kparams["b_rz"], kparams["b_in"], kparams["b_hn"])

    h_final = out_seq[-1]
    return out_seq, h_final


def encoder_rnn_forward(input_vec, hidden, kparams, n_layers=1):
    """Exact EncoderRNN.forward semantics (one token, batch 1).

    input_vec: any shape with input_size total elements (viewed to (1,1,-1))
    hidden   : (1, 1, hidden_size)
    returns  : (output (1,1,H), hidden (1,1,H))
    """
    H = hidden.shape[-1]
    embedded = input_vec.reshape(1, 1, -1).astype(jnp.float32)   # input.view(1, 1, -1)
    x_seq = embedded                                              # (T=1, B=1, IN)
    h0 = hidden.reshape(1, H).astype(jnp.float32)                 # (B=1, H)
    out_seq, h_final = encoder_gru_sequence(x_seq, h0, kparams, n_layers)
    # Single-step GRU: output == new hidden.
    return out_seq.reshape(1, 1, H), h_final.reshape(1, 1, H)


# ---------------------------------------------------------------------------
# Parameters
# ---------------------------------------------------------------------------
def init_params(key, input_size, hidden_size):
    """Deterministic init matching PyTorch nn.GRU param shapes (gate order r,z,n)."""
    k = 1.0 / jnp.sqrt(jnp.float32(hidden_size))
    keys = jax.random.split(key, 5)
    w_ih = jax.random.uniform(keys[0], (3 * hidden_size, input_size), jnp.float32, -k, k)
    w_hh = jax.random.uniform(keys[1], (3 * hidden_size, hidden_size), jnp.float32, -k, k)
    b_ih = jax.random.uniform(keys[2], (3 * hidden_size,), jnp.float32, -k, k)
    b_hh = jax.random.uniform(keys[3], (3 * hidden_size,), jnp.float32, -k, k)
    embedding = jax.random.normal(keys[4], (input_size, hidden_size), jnp.float32)
    return {"w_ih": w_ih, "w_hh": w_hh, "b_ih": b_ih, "b_hh": b_hh,
            "embedding": embedding}   # embedding unused in forward (matches PyTorch)


def pack_params_for_kernel(params):
    """One-time host-side repack: fused/transposed bf16 weights, folded r/z bias."""
    w_ih, w_hh = params["w_ih"], params["w_hh"]          # (3H, IN), (3H, H)
    b_ih, b_hh = params["b_ih"], params["b_hh"]          # (3H,)
    H = w_hh.shape[-1]
    w_ih_t = w_ih.T                                       # (IN, 3H), cols [r|z|n]
    w_hh_t = w_hh.T                                       # (H,  3H), cols [r|z|n]
    w_rz = jnp.concatenate([w_ih_t[:, :2 * H], w_hh_t[:, :2 * H]],
                           axis=0).astype(jnp.bfloat16)   # (IN+H, 2H)
    w_in = w_ih_t[:, 2 * H:].astype(jnp.bfloat16)         # (IN, H)
    w_hn = w_hh_t[:, 2 * H:].astype(jnp.bfloat16)         # (H, H)
    b_rz = (b_ih[:2 * H] + b_hh[:2 * H]).reshape(1, 2 * H).astype(jnp.float32)
    b_in = b_ih[2 * H:].reshape(1, H).astype(jnp.float32)
    b_hn = b_hh[2 * H:].reshape(1, H).astype(jnp.float32)
    return {"w_rz": w_rz, "w_in": w_in, "w_hn": w_hn,
            "b_rz": b_rz, "b_in": b_in, "b_hn": b_hn}


# ---------------------------------------------------------------------------
# Pure-JAX f32 reference (PyTorch nn.GRU semantics) for verification
# ---------------------------------------------------------------------------
def _gru_cell_ref(x, h, w_ih, w_hh, b_ih, b_hh):
    H = h.shape[-1]
    gi = x @ w_ih.T + b_ih
    gh = h @ w_hh.T + b_hh
    r = jax.nn.sigmoid(gi[:, 0:H] + gh[:, 0:H])
    z = jax.nn.sigmoid(gi[:, H:2 * H] + gh[:, H:2 * H])
    n = jnp.tanh(gi[:, 2 * H:] + r * gh[:, 2 * H:])
    return (1.0 - z) * n + z * h


def encoder_sequence_ref(x_seq, h0, params, n_layers):
    w_ih, w_hh = params["w_ih"], params["w_hh"]
    b_ih, b_hh = params["b_ih"], params["b_hh"]
    h = h0
    outs = []
    for t in range(x_seq.shape[0]):
        h = _gru_cell_ref(x_seq[t], h, w_ih, w_hh, b_ih, b_hh)
        for _ in range(n_layers - 1):
            h = _gru_cell_ref(h, h, w_ih, w_hh, b_ih, b_hh)
        outs.append(h)
    return jnp.stack(outs, axis=0), h


# ---------------------------------------------------------------------------
# Demo / self-test
# ---------------------------------------------------------------------------
if __name__ == "__main__":
    # Lane-dense small sizes: feature dims multiples of 128, batch a sublane multiple.
    input_size = 128     # nn.GRU(input_size, hidden_size)
    hidden_size = 128
    n_layers = 2         # exercises the fused in-kernel layer loop
    T, B = 8, 8          # sequence-fused, batched demo

    key = jax.random.PRNGKey(0)
    kparam, kx1, kx2, kh = jax.random.split(key, 4)

    params = init_params(kparam, input_size, hidden_size)
    kparams = pack_params_for_kernel(params)

    # --- Demo A: exact module forward() semantics (one token, batch 1) ---
    input_vec = jax.random.normal(kx1, (input_size,), jnp.float32)
    hidden0 = jnp.zeros((1, 1, hidden_size), jnp.float32)          # initHidden()
    output, hidden = encoder_rnn_forward(input_vec, hidden0, kparams, n_layers=n_layers)
    jax.block_until_ready((output, hidden))

    assert output.shape == (1, 1, hidden_size)
    assert hidden.shape == (1, 1, hidden_size)
    ref_seq_a, ref_h_a = encoder_sequence_ref(
        input_vec.reshape(1, 1, -1), hidden0.reshape(1, hidden_size), params, n_layers)
    err_a = jnp.max(jnp.abs(output.reshape(1, hidden_size) - ref_h_a))
    assert bool(jnp.all(jnp.isfinite(output)))
    assert float(err_a) < 5e-2          # bf16 matmul operands, f32 accumulation
    assert bool(jnp.allclose(output, hidden))   # single-step GRU: output == hidden

    # --- Demo B: sequence + batch fused (T forward() calls in one pallas_call) ---
    x_seq = jax.random.normal(kx2, (T, B, input_size), jnp.float32)
    h0 = 0.5 * jax.random.normal(kh, (B, hidden_size), jnp.float32)
    out_seq, h_final = encoder_gru_sequence(x_seq, h0, kparams, n_layers=n_layers)
    jax.block_until_ready((out_seq, h_final))

    ref_seq_b, ref_h_b = encoder_sequence_ref(x_seq, h0, params, n_layers)
    assert out_seq.shape == (T, B, hidden_size)
    assert bool(jnp.all(jnp.isfinite(out_seq)))
    err_b = jnp.max(jnp.abs(out_seq - ref_seq_b))
    err_h = jnp.max(jnp.abs(h_final - ref_h_b))
    assert float(err_b) < 5e-2
    assert float(err_h) < 5e-2

    print("KERNEL_OK")
</pallas_src>

<mosaic_0001>
module attributes {stable_mosaic.version = 11 : i64} {
  func.func @gru_seq_kernel(%arg0: i32, %arg1: memref<1x128xf32, #tpu.memory_space<vmem>>, %arg2: memref<1x1x128xf32, #tpu.memory_space<vmem>>, %arg3: memref<256x256xbf16, #tpu.memory_space<vmem>>, %arg4: memref<128x128xbf16, #tpu.memory_space<vmem>>, %arg5: memref<128x128xbf16, #tpu.memory_space<vmem>>, %arg6: memref<1x256xf32, #tpu.memory_space<vmem>>, %arg7: memref<1x128xf32, #tpu.memory_space<vmem>>, %arg8: memref<1x128xf32, #tpu.memory_space<vmem>>, %arg9: memref<1x1x128xf32, #tpu.memory_space<vmem>>, %arg10: memref<1x128xf32, #tpu.memory_space<vmem>>) attributes {dimension_semantics = [#tpu.dimension_semantics<arbitrary>], iteration_bounds = array<i64: 1>, scalar_prefetch = 0 : i64, scratch_operands = 1 : i64, tpu.core_type = #tpu.core_type<tc>, window_params = [{pipeline_mode = #tpu.pipeline_mode<synchronous>, transform_indices = @transform_0, window_bounds = array<i64: 1, 128>}, {transform_indices = @transform_1, window_bounds = array<i64: 1, 1, 128>}, {pipeline_mode = #tpu.pipeline_mode<synchronous>, transform_indices = @transform_2, window_bounds = array<i64: 256, 256>}, {pipeline_mode = #tpu.pipeline_mode<synchronous>, transform_indices = @transform_3, window_bounds = array<i64: 128, 128>}, {pipeline_mode = #tpu.pipeline_mode<synchronous>, transform_indices = @transform_4, window_bounds = array<i64: 128, 128>}, {pipeline_mode = #tpu.pipeline_mode<synchronous>, transform_indices = @transform_5, window_bounds = array<i64: 1, 256>}, {pipeline_mode = #tpu.pipeline_mode<synchronous>, transform_indices = @transform_6, window_bounds = array<i64: 1, 128>}, {pipeline_mode = #tpu.pipeline_mode<synchronous>, transform_indices = @transform_7, window_bounds = array<i64: 1, 128>}, {transform_indices = @transform_8, window_bounds = array<i64: 1, 1, 128>}]} {
    %c0_i32 = arith.constant 0 : i32
    %0 = arith.cmpi eq, %arg0, %c0_i32 : i32
    %1 = arith.extui %0 : i1 to i32
    %c0_i32_0 = arith.constant 0 : i32
    %2 = arith.cmpi ne, %1, %c0_i32_0 : i32
    scf.if %2 {
      %c0_33 = arith.constant 0 : index
      %c0_34 = arith.constant 0 : index
      %76 = vector.load %arg1[%c0_33, %c0_34] : memref<1x128xf32, #tpu.memory_space<vmem>>, vector<1x128xf32>
      %c0_35 = arith.constant 0 : index
      %c0_36 = arith.constant 0 : index
      %77 = vector.load %arg10[%c0_35, %c0_36] : memref<1x128xf32, #tpu.memory_space<vmem>>, vector<1x128xf32>
      tpu.vector_store %arg10[%c0_35, %c0_36], %76 {strides = array<i32>} : memref<1x128xf32, #tpu.memory_space<vmem>>, vector<1x128xf32>,
    } else {
    }
    %c0 = arith.constant 0 : index
    %c0_1 = arith.constant 0 : index
    %3 = vector.load %arg3[%c0, %c0_1] : memref<256x256xbf16, #tpu.memory_space<vmem>>, vector<256x256xbf16>
    %c0_2 = arith.constant 0 : index
    %c0_3 = arith.constant 0 : index
    %4 = vector.load %arg4[%c0_2, %c0_3] : memref<128x128xbf16, #tpu.memory_space<vmem>>, vector<128x128xbf16>
    %c0_4 = arith.constant 0 : index
    %c0_5 = arith.constant 0 : index
    %5 = vector.load %arg5[%c0_4, %c0_5] : memref<128x128xbf16, #tpu.memory_space<vmem>>, vector<128x128xbf16>
    %c0_6 = arith.constant 0 : index
    %c0_7 = arith.constant 0 : index
    %6 = vector.load %arg6[%c0_6, %c0_7] : memref<1x256xf32, #tpu.memory_space<vmem>>, vector<1x256xf32>
    %c0_8 = arith.constant 0 : index
    %c0_9 = arith.constant 0 : index
    %7 = vector.load %arg7[%c0_8, %c0_9] : memref<1x128xf32, #tpu.memory_space<vmem>>, vector<1x128xf32>
    %c0_10 = arith.constant 0 : index
    %c0_11 = arith.constant 0 : index
    %8 = vector.load %arg8[%c0_10, %c0_11] : memref<1x128xf32, #tpu.memory_space<vmem>>, vector<1x128xf32>
    %c0_12 = arith.constant 0 : index
    %c0_13 = arith.constant 0 : index
    %c0_14 = arith.constant 0 : index
    %9 = vector.load %arg2[%c0_12, %c0_13, %c0_14] : memref<1x1x128xf32, #tpu.memory_space<vmem>>, vector<1x1x128xf32>
    %10 = vector.shape_cast %9 : vector<1x1x128xf32> to vector<1x128xf32>
    %c0_15 = arith.constant 0 : index
    %c0_16 = arith.constant 0 : index
    %11 = vector.load %arg10[%c0_15, %c0_16] : memref<1x128xf32, #tpu.memory_space<vmem>>, vector<1x128xf32>
    %12 = tpu.concatenate %10, %11 in 1 : vector<1x128xf32>, vector<1x128xf32> -> vector<1x256xf32>
    %13 = arith.truncf %12 : vector<1x256xf32> to vector<1x256xbf16>
    %cst = arith.constant dense<0.000000e+00> : vector<1x256xf32>
    %14 = tpu.matmul %13, %3, %cst {dimension_numbers = #tpu.dot_dimension_numbers<[1], [0], [0], [1], [0, 0, 1, 1], [], []>} : vector<1x256xbf16>, vector<256x256xbf16>, vector<1x256xf32> -> vector<1x256xf32>
    %15 = arith.addf %14, %6 : vector<1x256xf32>
    %16 = vector.extract_strided_slice %15 {offsets = [0, 0], sizes = [1, 128], strides = [1, 1]} : vector<1x256xf32> to vector<1x128xf32>
    %17 = arith.negf %16 : vector<1x128xf32>
    %18 = math.exp %17 : vector<1x128xf32>
    %cst_17 = arith.constant 1.000000e+00 : f32
    %19 = vector.broadcast %cst_17 : f32 to vector<1x128xf32>
    %20 = arith.addf %19, %18 : vector<1x128xf32>
    %21 = arith.divf %19, %20 : vector<1x128xf32>
    %22 = vector.extract_strided_slice %15 {offsets = [0, 128], sizes = [1, 128], strides = [1, 1]} : vector<1x256xf32> to vector<1x128xf32>
    %23 = arith.negf %22 : vector<1x128xf32>
    %24 = math.exp %23 : vector<1x128xf32>
    %cst_18 = arith.constant 1.000000e+00 : f32
    %25 = vector.broadcast %cst_18 : f32 to vector<1x128xf32>
    %26 = arith.addf %25, %24 : vector<1x128xf32>
    %27 = arith.divf %25, %26 : vector<1x128xf32>
    %28 = arith.truncf %10 : vector<1x128xf32> to vector<1x128xbf16>
    %cst_19 = arith.constant dense<0.000000e+00> : vector<1x128xf32>
    %29 = tpu.matmul %28, %4, %cst_19 {dimension_numbers = #tpu.dot_dimension_numbers<[1], [0], [0], [1], [0, 0, 1, 1], [], []>} : vector<1x128xbf16>, vector<128x128xbf16>, vector<1x128xf32> -> vector<1x128xf32>
    %30 = arith.addf %29, %7 : vector<1x128xf32>
    %31 = arith.truncf %11 : vector<1x128xf32> to vector<1x128xbf16>
    %cst_20 = arith.constant dense<0.000000e+00> : vector<1x128xf32>
    %32 = tpu.matmul %31, %5, %cst_20 {dimension_numbers = #tpu.dot_dimension_numbers<[1], [0], [0], [1], [0, 0, 1, 1], [], []>} : vector<1x128xbf16>, vector<128x128xbf16>, vector<1x128xf32> -> vector<1x128xf32>
    %33 = arith.addf %32, %8 : vector<1x128xf32>
    %34 = arith.mulf %21, %33 : vector<1x128xf32>
    %35 = arith.addf %30, %34 : vector<1x128xf32>
    %36 = math.tanh %35 : vector<1x128xf32>
    %cst_21 = arith.constant 1.000000e+00 : f32
    %37 = vector.broadcast %cst_21 : f32 to vector<1x128xf32>
    %38 = arith.subf %37, %27 : vector<1x128xf32>
    %39 = arith.mulf %38, %36 : vector<1x128xf32>
    %40 = arith.mulf %27, %11 : vector<1x128xf32>
    %41 = arith.addf %39, %40 : vector<1x128xf32>
    %42 = tpu.concatenate %41, %41 in 1 : vector<1x128xf32>, vector<1x128xf32> -> vector<1x256xf32>
    %43 = arith.truncf %42 : vector<1x256xf32> to vector<1x256xbf16>
    %cst_22 = arith.constant dense<0.000000e+00> : vector<1x256xf32>
    %44 = tpu.matmul %43, %3, %cst_22 {dimension_numbers = #tpu.dot_dimension_numbers<[1], [0], [0], [1], [0, 0, 1, 1], [], []>} : vector<1x256xbf16>, vector<256x256xbf16>, vector<1x256xf32> -> vector<1x256xf32>
    %45 = arith.addf %44, %6 : vector<1x256xf32>
    %46 = vector.extract_strided_slice %45 {offsets = [0, 0], sizes = [1, 128], strides = [1, 1]} : vector<1x256xf32> to vector<1x128xf32>
    %47 = arith.negf %46 : vector<1x128xf32>
    %48 = math.exp %47 : vector<1x128xf32>
    %cst_23 = arith.constant 1.000000e+00 : f32
    %49 = vector.broadcast %cst_23 : f32 to vector<1x128xf32>
    %50 = arith.addf %49, %48 : vector<1x128xf32>
    %51 = arith.divf %49, %50 : vector<1x128xf32>
    %52 = vector.extract_strided_slice %45 {offsets = [0, 128], sizes = [1, 128], strides = [1, 1]} : vector<1x256xf32> to vector<1x128xf32>
    %53 = arith.negf %52 : vector<1x128xf32>
    %54 = math.exp %53 : vector<1x128xf32>
    %cst_24 = arith.constant 1.000000e+00 : f32
    %55 = vector.broadcast %cst_24 : f32 to vector<1x128xf32>
    %56 = arith.addf %55, %54 : vector<1x128xf32>
    %57 = arith.divf %55, %56 : vector<1x128xf32>
    %58 = arith.truncf %41 : vector<1x128xf32> to vector<1x128xbf16>
    %cst_25 = arith.constant dense<0.000000e+00> : vector<1x128xf32>
    %59 = tpu.matmul %58, %4, %cst_25 {dimension_numbers = #tpu.dot_dimension_numbers<[1], [0], [0], [1], [0, 0, 1, 1], [], []>} : vector<1x128xbf16>, vector<128x128xbf16>, vector<1x128xf32> -> vector<1x128xf32>
    %60 = arith.addf %59, %7 : vector<1x128xf32>
    %61 = arith.truncf %41 : vector<1x128xf32> to vector<1x128xbf16>
    %cst_26 = arith.constant dense<0.000000e+00> : vector<1x128xf32>
    %62 = tpu.matmul %61, %5, %cst_26 {dimension_numbers = #tpu.dot_dimension_numbers<[1], [0], [0], [1], [0, 0, 1, 1], [], []>} : vector<1x128xbf16>, vector<128x128xbf16>, vector<1x128xf32> -> vector<1x128xf32>
    %63 = arith.addf %62, %8 : vector<1x128xf32>
    %64 = arith.mulf %51, %63 : vector<1x128xf32>
    %65 = arith.addf %60, %64 : vector<1x128xf32>
    %66 = math.tanh %65 : vector<1x128xf32>
    %cst_27 = arith.constant 1.000000e+00 : f32
    %67 = vector.broadcast %cst_27 : f32 to vector<1x128xf32>
    %68 = arith.subf %67, %57 : vector<1x128xf32>
    %69 = arith.mulf %68, %66 : vector<1x128xf32>
    %70 = arith.mulf %57, %41 : vector<1x128xf32>
    %71 = arith.addf %69, %70 : vector<1x128xf32>
    %c0_28 = arith.constant 0 : index
    %c0_29 = arith.constant 0 : index
    %72 = vector.load %arg10[%c0_28, %c0_29] : memref<1x128xf32, #tpu.memory_space<vmem>>, vector<1x128xf32>
    tpu.vector_store %arg10[%c0_28, %c0_29], %71 {strides = array<i32>} : memref<1x128xf32, #tpu.memory_space<vmem>>, vector<1x128xf32>,
    %c0_30 = arith.constant 0 : index
    %c0_31 = arith.constant 0 : index
    %c0_32 = arith.constant 0 : index
    %73 = vector.load %arg9[%c0_30, %c0_31, %c0_32] : memref<1x1x128xf32, #tpu.memory_space<vmem>>, vector<1x1x128xf32>
    %74 = vector.shape_cast %73 : vector<1x1x128xf32> to vector<1x128xf32>
    %75 = vector.shape_cast %71 : vector<1x128xf32> to vector<1x1x128xf32>
    tpu.vector_store %arg9[%c0_30, %c0_31, %c0_32], %75 {strides = array<i32>} : memref<1x1x128xf32, #tpu.memory_space<vmem>>, vector<1x1x128xf32>,
    return
  }
  func.func @transform_0(%arg0: i32) -> (i32, i32) {
    %c0_i32 = arith.constant 0 : i32
    %c0_i32_0 = arith.constant 0 : i32
    %c0_i32_1 = arith.constant 0 : i32
    return %c0_i32, %c0_i32_0 : i32, i32
  }
  func.func @transform_1(%arg0: i32) -> (i32, i32, i32) {
    %c0_i32 = arith.constant 0 : i32
    %c0_i32_0 = arith.constant 0 : i32
    %c0_i32_1 = arith.constant 0 : i32
    return %arg0, %c0_i32, %c0_i32_0 : i32, i32, i32
  }
  func.func @transform_2(%arg0: i32) -> (i32, i32) {
    %c0_i32 = arith.constant 0 : i32
    %c0_i32_0 = arith.constant 0 : i32
    %c0_i32_1 = arith.constant 0 : i32
    return %c0_i32, %c0_i32_0 : i32, i32
  }
  func.func @transform_3(%arg0: i32) -> (i32, i32) {
    %c0_i32 = arith.constant 0 : i32
    %c0_i32_0 = arith.constant 0 : i32
    %c0_i32_1 = arith.constant 0 : i32
    return %c0_i32, %c0_i32_0 : i32, i32
  }
  func.func @transform_4(%arg0: i32) -> (i32, i32) {
    %c0_i32 = arith.constant 0 : i32
    %c0_i32_0 = arith.constant 0 : i32
    %c0_i32_1 = arith.constant 0 : i32
    return %c0_i32, %c0_i32_0 : i32, i32
  }
  func.func @transform_5(%arg0: i32) -> (i32, i32) {
    %c0_i32 = arith.constant 0 : i32
    %c0_i32_0 = arith.constant 0 : i32
    %c0_i32_1 = arith.constant 0 : i32
    return %c0_i32, %c0_i32_0 : i32, i32
  }
  func.func @transform_6(%arg0: i32) -> (i32, i32) {
    %c0_i32 = arith.constant 0 : i32
    %c0_i32_0 = arith.constant 0 : i32
    %c0_i32_1 = arith.constant 0 : i32
    return %c0_i32, %c0_i32_0 : i32, i32
  }
  func.func @transform_7(%arg0: i32) -> (i32, i32) {
    %c0_i32 = arith.constant 0 : i32
    %c0_i32_0 = arith.constant 0 : i32
    %c0_i32_1 = arith.constant 0 : i32
    return %c0_i32, %c0_i32_0 : i32, i32
  }
  func.func @transform_8(%arg0: i32) -> (i32, i32, i32) {
    %c0_i32 = arith.constant 0 : i32
    %c0_i32_0 = arith.constant 0 : i32
    %c0_i32_1 = arith.constant 0 : i32
    return %arg0, %c0_i32, %c0_i32_0 : i32, i32, i32
  }
}

</mosaic_0001>

<llo_original>
// kernel: tpu_custom_call.1
$region0: #{tpu_custom_call.1}
  #allocation0 [shape = 'u32[]', space=smem, size = 0x4, offset = 0x4, fixed_abs, tag = 'smem constant byte address 0x4 - core index']
  #allocation1 [shape = 'u32[144,128]{1,0:T(1,128)}', space=vmem, size = 0x12000, scoped, tag = 'internal scratch']
  #allocation2 [shape = 'f32[1,128]{1,0:T(1,128)}', space=vmem, size = 0x200, scoped, tag = 'scratch operand']
  %s0 = inlined_call_operand.hbm [shape: f32[1,128], index: 0, kind: input, shape index: {}]
  %s1 = inlined_call_operand.vmem [shape: f32[1,1,128], index: 1, kind: input, shape index: {}]
  %s2 = inlined_call_operand.hbm [shape: bf16[256,256], index: 2, kind: input, shape index: {}]
  %s3 = inlined_call_operand.hbm [shape: bf16[128,128], index: 3, kind: input, shape index: {}]
  %s4 = inlined_call_operand.hbm [shape: bf16[128,128], index: 4, kind: input, shape index: {}]
  %s5 = inlined_call_operand.vmem [shape: f32[1,256], index: 5, kind: input, shape index: {}]
  %s6 = inlined_call_operand.vmem [shape: f32[1,128], index: 6, kind: input, shape index: {}]
  %s7 = inlined_call_operand.vmem [shape: f32[1,128], index: 7, kind: input, shape index: {}]
  %s8 = inlined_call_operand.hbm [shape: f32[1,1,128], index: 8, kind: output, shape index: {}]
  %s9 = sld [smem:[#allocation0]]
  $region62: #{tpu_custom_call.1} parent=0
    _
  %s11 = ssub.s32 1, %s9
  %s12 = scalar_select 0, %s11, %s9
  $region1: #{tpu_custom_call.1} parent=0
    #allocation3 [shape = 'u8[512]{0}', space=vmem, size = 0x400, scoped, tag = 'input window, operand 0, single buffered']
    #allocation4 [shape = 's32[1]{0}', space=sflag, size = 0x4, scoped, tag = 'scoped memory for tpu_custom_call.1']
    #allocation5 [shape = 's32[1]{0}', space=sflag, size = 0x4, scoped, tag = 'scoped memory for tpu_custom_call.1']
    #allocation6 [shape = 'u8[131072]{0}', space=vmem, size = 0x20000, scoped, tag = 'input window, operand 2, single buffered']
    #allocation7 [shape = 's32[1]{0}', space=sflag, size = 0x4, scoped, tag = 'scoped memory for tpu_custom_call.1']
    #allocation8 [shape = 'u8[32768]{0}', space=vmem, size = 0x8000, scoped, tag = 'input window, operand 3, single buffered']
    #allocation9 [shape = 'u8[32768]{0}', space=vmem, size = 0x8000, scoped, tag = 'input window, operand 4, single buffered']
    #allocation10 [shape = 's32[1]{0}', space=sflag, size = 0x4, scoped, tag = 'scoped memory for tpu_custom_call.1']
    #allocation11 [shape = 'u8[512]{0}', space=vmem, size = 0x400, scoped, tag = 'output window, operand 0, single buffered']
    %13 = vsyncpa [#allocation4], 0
    %14 = vsyncpa [#allocation7], 0
    %15 = vsyncpa [#allocation10], 0
    %16 = vsyncpa [#allocation5], 0
    // Predicated region
    $region2: #{tpu_custom_call.1} parent=1 // pred_check
      _
    $region3: #{tpu_custom_call.1} parent=1 // pred_check_branch
      %18 = sbr.rel (0) target = $region5
    $region4: #{tpu_custom_call.1} parent=1 // pred_region
      %s20 = ssub.s32 16, 16
      %21 = vsyncadd [#allocation4], %s20
      %s23 = sshll.u32 [#allocation3], 4
      %s24 = int_to_ptr.vmem [resolvable:$true] %s23
      %26 = dma.hbm_to_vmem [thread:$0]  %s0, 16, %s24, [#allocation4]
    $region5: #{tpu_custom_call.1} parent=1 // pred_fallthru
      _
    // Predicated region
    $region6: #{tpu_custom_call.1} parent=1 // pred_check
      _
    $region7: #{tpu_custom_call.1} parent=1 // pred_check_branch
      %28 = sbr.rel (0) target = $region9
    $region8: #{tpu_custom_call.1} parent=1 // pred_region
      _
    $region9: #{tpu_custom_call.1} parent=1 // pred_fallthru
      _
    // Predicated region
    $region10: #{tpu_custom_call.1} parent=1 // pred_check
      _
    $region11: #{tpu_custom_call.1} parent=1 // pred_check_branch
      %30 = sbr.rel (0) target = $region13
    $region12: #{tpu_custom_call.1} parent=1 // pred_region
      %s32 = ssub.s32 4096, 4096
      %33 = vsyncadd [#allocation7], %s32
      %s34 = sshll.u32 [#allocation6], 4
      %s35 = int_to_ptr.vmem [resolvable:$true] %s34
      %40 = dma.hbm_to_vmem [thread:$0]  %s2, 4096, %s35, [#allocation7], 128, 128, 8
    $region13: #{tpu_custom_call.1} parent=1 // pred_fallthru
      _
    // Predicated region
    $region14: #{tpu_custom_call.1} parent=1 // pred_check
      _
    $region15: #{tpu_custom_call.1} parent=1 // pred_check_branch
      %42 = sbr.rel (0) target = $region17
    $region16: #{tpu_custom_call.1} parent=1 // pred_region
      %s44 = ssub.s32 1024, 1024
      %45 = vsyncadd [#allocation7], %s44
      %s46 = sshll.u32 [#allocation8], 4
      %s47 = int_to_ptr.vmem [resolvable:$true] %s46
      %52 = dma.hbm_to_vmem [thread:$0]  %s3, 1024, %s47, [#allocation7], 64, 64, 4
    $region17: #{tpu_custom_call.1} parent=1 // pred_fallthru
      _
    // Predicated region
    $region18: #{tpu_custom_call.1} parent=1 // pred_check
      _
    $region19: #{tpu_custom_call.1} parent=1 // pred_check_branch
      %54 = sbr.rel (0) target = $region21
    $region20: #{tpu_custom_call.1} parent=1 // pred_region
      %s56 = ssub.s32 1024, 1024
      %57 = vsyncadd [#allocation10], %s56
      %s58 = sshll.u32 [#allocation9], 4
      %s59 = int_to_ptr.vmem [resolvable:$true] %s58
      %64 = dma.hbm_to_vmem [thread:$0]  %s4, 1024, %s59, [#allocation10], 64, 64, 4
    $region21: #{tpu_custom_call.1} parent=1 // pred_fallthru
      _
    // Predicated region
    $region22: #{tpu_custom_call.1} parent=1 // pred_check
      _
    $region23: #{tpu_custom_call.1} parent=1 // pred_check_branch
      %66 = sbr.rel (0) target = $region25
    $region24: #{tpu_custom_call.1} parent=1 // pred_region
      _
    $region25: #{tpu_custom_call.1} parent=1 // pred_fallthru
      _
    // Predicated region
    $region26: #{tpu_custom_call.1} parent=1 // pred_check
      _
    $region27: #{tpu_custom_call.1} parent=1 // pred_check_branch
      %68 = sbr.rel (0) target = $region29
    $region28: #{tpu_custom_call.1} parent=1 // pred_region
      _
    $region29: #{tpu_custom_call.1} parent=1 // pred_fallthru
      _
    // Predicated region
    $region30: #{tpu_custom_call.1} parent=1 // pred_check
      _
    $region31: #{tpu_custom_call.1} parent=1 // pred_check_branch
      %70 = sbr.rel (0) target = $region33
    $region32: #{tpu_custom_call.1} parent=1 // pred_region
      _
    $region33: #{tpu_custom_call.1} parent=1 // pred_fallthru
      _
    // Predicated region
    $region34: #{tpu_custom_call.1} parent=1 // pred_check
      _
    $region35: #{tpu_custom_call.1} parent=1 // pred_check_branch
      %72 = sbr.rel (0) target = $region37
    $region36: #{tpu_custom_call.1} parent=1 // pred_region
      %73 = dma.done [#allocation4], 16
    $region37: #{tpu_custom_call.1} parent=1 // pred_fallthru
      _
    // Predicated region
    $region38: #{tpu_custom_call.1} parent=1 // pred_check
      _
    $region39: #{tpu_custom_call.1} parent=1 // pred_check_branch
      %75 = sbr.rel (0) target = $region41
    $region40: #{tpu_custom_call.1} parent=1 // pred_region
      %76 = dma.done [#allocation7], 4096
    $region41: #{tpu_custom_call.1} parent=1 // pred_fallthru
      _
    // Predicated region
    $region42: #{tpu_custom_call.1} parent=1 // pred_check
      _
    $region43: #{tpu_custom_call.1} parent=1 // pred_check_branch
      %78 = sbr.rel (0) target = $region45
    $region44: #{tpu_custom_call.1} parent=1 // pred_region
      %79 = dma.done [#allocation7], 1024
    $region45: #{tpu_custom_call.1} parent=1 // pred_fallthru
      _
    // Predicated region
    $region46: #{tpu_custom_call.1} parent=1 // pred_check
      _
    $region47: #{tpu_custom_call.1} parent=1 // pred_check_branch
      %81 = sbr.rel (0) target = $region49
    $region48: #{tpu_custom_call.1} parent=1 // pred_region
      %82 = dma.done [#allocation10], 1024
    $region49: #{tpu_custom_call.1} parent=1 // pred_fallthru
      _
    %p84 = scmp.eq.s32.totalorder 0, 0
    // Predicated region
    $region50: #{tpu_custom_call.1} parent=1 // pred_check
      %p85 = pneg %p84
    $region51: #{tpu_custom_call.1} parent=1 // pred_check_branch
      %87 = sbr.rel (%p85) target = $region53
    $region52: #{tpu_custom_call.1} parent=1 // pred_region
      %v88 = vld [vmem:[#allocation3] sm:$0x1]
      %89 = vst [vmem:[#allocation2] sm:$0x1] %v88
    $region53: #{tpu_custom_call.1} parent=1 // pred_fallthru
      _
    %v90 = vld [vmem:[#allocation6] sm:$0xff]
    %v91 = vld [vmem:[#allocation6 + $0x8] sm:$0xff]
    %v92 = vld [vmem:[#allocation6 + $0x10] sm:$0xff]
    %v93 = vld [vmem:[#allocation6 + $0x18] sm:$0xff]
    %v94 = vld [vmem:[#allocation6 + $0x20] sm:$0xff]
    %v95 = vld [vmem:[#allocation6 + $0x28] sm:$0xff]
    %v96 = vld [vmem:[#allocation6 + $0x30] sm:$0xff]
    %v97 = vld [vmem:[#allocation6 + $0x38] sm:$0xff]
    %v98 = vld [vmem:[#allocation6 + $0x40] sm:$0xff]
    %v99 = vld [vmem:[#allocation6 + $0x48] sm:$0xff]
    %v100 = vld [vmem:[#allocation6 + $0x50] sm:$0xff]
    %v101 = vld [vmem:[#allocation6 + $0x58] sm:$0xff]
    %v102 = vld [vmem:[#allocation6 + $0x60] sm:$0xff]
    %v103 = vld [vmem:[#allocation6 + $0x68] sm:$0xff]
    %v104 = vld [vmem:[#allocation6 + $0x70] sm:$0xff]
    %v105 = vld [vmem:[#allocation6 + $0x78] sm:$0xff]
    %v106 = vld [vmem:[#allocation6 + $0x80] sm:$0xff]
    %v107 = vld [vmem:[#allocation6 + $0x88] sm:$0xff]
    %v108 = vld [vmem:[#allocation6 + $0x90] sm:$0xff]
    %v109 = vld [vmem:[#allocation6 + $0x98] sm:$0xff]
    %v110 = vld [vmem:[#allocation6 + $0xa0] sm:$0xff]
    %v111 = vld [vmem:[#allocation6 + $0xa8] sm:$0xff]
    %v112 = vld [vmem:[#allocation6 + $0xb0] sm:$0xff]
    %v113 = vld [vmem:[#allocation6 + $0xb8] sm:$0xff]
    %v114 = vld [vmem:[#allocation6 + $0xc0] sm:$0xff]
    %v115 = vld [vmem:[#allocation6 + $0xc8] sm:$0xff]
    %v116 = vld [vmem:[#allocation6 + $0xd0] sm:$0xff]
    %v117 = vld [vmem:[#allocation6 + $0xd8] sm:$0xff]
    %v118 = vld [vmem:[#allocation6 + $0xe0] sm:$0xff]
    %v119 = vld [vmem:[#allocation6 + $0xe8] sm:$0xff]
    %v120 = vld [vmem:[#allocation6 + $0xf0] sm:$0xff]
    %v121 = vld [vmem:[#allocation6 + $0xf8] sm:$0xff]
    %v122 = vld [vmem:[#allocation8] sm:$0xf]
    %v123 = vld [vmem:[#allocation8 + $0x4] sm:$0xf]
    %v124 = vld [vmem:[#allocation8 + $0x8] sm:$0xf]
    %v125 = vld [vmem:[#allocation8 + $0xc] sm:$0xf]
    %v126 = vld [vmem:[#allocation8 + $0x10] sm:$0xf]
    %v127 = vld [vmem:[#allocation8 + $0x14] sm:$0xf]
    %v128 = vld [vmem:[#allocation8 + $0x18] sm:$0xf]
    %v129 = vld [vmem:[#allocation8 + $0x1c] sm:$0xf]
    %v130 = vld [vmem:[#allocation8 + $0x20] sm:$0xf]
    %v131 = vld [vmem:[#allocation8 + $0x24] sm:$0xf]
    %v132 = vld [vmem:[#allocation8 + $0x28] sm:$0xf]
    %v133 = vld [vmem:[#allocation8 + $0x2c] sm:$0xf]
    %v134 = vld [vmem:[#allocation8 + $0x30] sm:$0xf]
    %v135 = vld [vmem:[#allocation8 + $0x34] sm:$0xf]
    %v136 = vld [vmem:[#allocation8 + $0x38] sm:$0xf]
    %v137 = vld [vmem:[#allocation8 + $0x3c] sm:$0xf]
    %v138 = vld [vmem:[#allocation9] sm:$0xf]
    %v139 = vld [vmem:[#allocation9 + $0x4] sm:$0xf]
    %v140 = vld [vmem:[#allocation9 + $0x8] sm:$0xf]
    %v141 = vld [vmem:[#allocation9 + $0xc] sm:$0xf]
    %v142 = vld [vmem:[#allocation9 + $0x10] sm:$0xf]
    %v143 = vld [vmem:[#allocation9 + $0x14] sm:$0xf]
    %v144 = vld [vmem:[#allocation9 + $0x18] sm:$0xf]
    %v145 = vld [vmem:[#allocation9 + $0x1c] sm:$0xf]
    %v146 = vld [vmem:[#allocation9 + $0x20] sm:$0xf]
    %v147 = vld [vmem:[#allocation9 + $0x24] sm:$0xf]
    %v148 = vld [vmem:[#allocation9 + $0x28] sm:$0xf]
    %v149 = vld [vmem:[#allocation9 + $0x2c] sm:$0xf]
    %v150 = vld [vmem:[#allocation9 + $0x30] sm:$0xf]
    %v151 = vld [vmem:[#allocation9 + $0x34] sm:$0xf]
    %v152 = vld [vmem:[#allocation9 + $0x38] sm:$0xf]
    %v153 = vld [vmem:[#allocation9 + $0x3c] sm:$0xf]
    %v154 = vld [vmem:[%s5] sm:$0x3]
    %v155 = vld [vmem:[%s6] sm:$0x1]
    %v156 = vld [vmem:[%s7] sm:$0x1]
    %v157 = vld [vmem:[%s1] sm:$0x1]
    %v158 = vld [vmem:[#allocation2] sm:$0x1]
    %v159 = vpack.c.bf16 %v157, %v157
    %v160 = vpack.c.bf16 %v158, %v158
    %v193 = vunpack.c.l.b16 %v90
    %v194 = vunpack.c.h.b16 %v90
    %v195 = vunpack.c.l.b16 %v91
    %v196 = vunpack.c.h.b16 %v91
    %v197 = vunpack.c.l.b16 %v92
    %v198 = vunpack.c.h.b16 %v92
    %v199 = vunpack.c.l.b16 %v93
    %v200 = vunpack.c.h.b16 %v93
    %v201 = vunpack.c.l.b16 %v94
    %v202 = vunpack.c.h.b16 %v94
    %v203 = vunpack.c.l.b16 %v95
    %v204 = vunpack.c.h.b16 %v95
    %v205 = vunpack.c.l.b16 %v96
    %v206 = vunpack.c.h.b16 %v96
    %v207 = vunpack.c.l.b16 %v97
    %v208 = vunpack.c.h.b16 %v97
    %v209 = vunpack.c.l.b16 %v98
    %v210 = vunpack.c.h.b16 %v98
    %v211 = vunpack.c.l.b16 %v99
    %v212 = vunpack.c.h.b16 %v99
    %v213 = vunpack.c.l.b16 %v100
    %v214 = vunpack.c.h.b16 %v100
    %v215 = vunpack.c.l.b16 %v101
    %v216 = vunpack.c.h.b16 %v101
    %v217 = vunpack.c.l.b16 %v102
    %v218 = vunpack.c.h.b16 %v102
    %v219 = vunpack.c.l.b16 %v103
    %v220 = vunpack.c.h.b16 %v103
    %v221 = vunpack.c.l.b16 %v104
    %v222 = vunpack.c.h.b16 %v104
    %v223 = vunpack.c.l.b16 %v105
    %v224 = vunpack.c.h.b16 %v105
    %v225 = vunpack.c.l.b16 %v106
    %v226 = vunpack.c.h.b16 %v106
    %v227 = vunpack.c.l.b16 %v107
    %v228 = vunpack.c.h.b16 %v107
    %v229 = vunpack.c.l.b16 %v108
    %v230 = vunpack.c.h.b16 %v108
    %v231 = vunpack.c.l.b16 %v109
    %v232 = vunpack.c.h.b16 %v109
    %v233 = vunpack.c.l.b16 %v110
    %v234 = vunpack.c.h.b16 %v110
    %v235 = vunpack.c.l.b16 %v111
    %v236 = vunpack.c.h.b16 %v111
    %v237 = vunpack.c.l.b16 %v112
    %v238 = vunpack.c.h.b16 %v112
    %v239 = vunpack.c.l.b16 %v113
    %v240 = vunpack.c.h.b16 %v113
    %v241 = vunpack.c.l.b16 %v114
    %v242 = vunpack.c.h.b16 %v114
    %v243 = vunpack.c.l.b16 %v115
    %v244 = vunpack.c.h.b16 %v115
    %v245 = vunpack.c.l.b16 %v116
    %v246 = vunpack.c.h.b16 %v116
    %v247 = vunpack.c.l.b16 %v117
    %v248 = vunpack.c.h.b16 %v117
    %v249 = vunpack.c.l.b16 %v118
    %v250 = vunpack.c.h.b16 %v118
    %v251 = vunpack.c.l.b16 %v119
    %v252 = vunpack.c.h.b16 %v119
    %v253 = vunpack.c.l.b16 %v120
    %v254 = vunpack.c.h.b16 %v120
    %v255 = vunpack.c.l.b16 %v121
    %v256 = vunpack.c.h.b16 %v121
    %v257 = vpack.c.b16 %v195, %v193
    %v258 = vpack.c.b16 %v196, %v194
    %v259 = vpack.c.b16 %v199, %v197
    %v260 = vpack.c.b16 %v200, %v198
    %v261 = vpack.c.b16 %v203, %v201
    %v262 = vpack.c.b16 %v204, %v202
    %v263 = vpack.c.b16 %v207, %v205
    %v264 = vpack.c.b16 %v208, %v206
    %v265 = vpack.c.b16 %v211, %v209
    %v266 = vpack.c.b16 %v212, %v210
    %v267 = vpack.c.b16 %v215, %v213
    %v268 = vpack.c.b16 %v216, %v214
    %v269 = vpack.c.b16 %v219, %v217
    %v270 = vpack.c.b16 %v220, %v218
    %v271 = vpack.c.b16 %v223, %v221
    %v272 = vpack.c.b16 %v224, %v222
    %v273 = vpack.c.b16 %v227, %v225
    %v274 = vpack.c.b16 %v228, %v226
    %v275 = vpack.c.b16 %v231, %v229
    %v276 = vpack.c.b16 %v232, %v230
    %v277 = vpack.c.b16 %v235, %v233
    %v278 = vpack.c.b16 %v236, %v234
    %v279 = vpack.c.b16 %v239, %v237
    %v280 = vpack.c.b16 %v240, %v238
    %v281 = vpack.c.b16 %v243, %v241
    %v282 = vpack.c.b16 %v244, %v242
    %v283 = vpack.c.b16 %v247, %v245
    %v284 = vpack.c.b16 %v248, %v246
    %v285 = vpack.c.b16 %v251, %v249
    %v286 = vpack.c.b16 %v252, %v250
    %v287 = vpack.c.b16 %v255, %v253
    %v288 = vpack.c.b16 %v256, %v254
    %v322 = vlaneseq
    %v323 = vshrl.u32 %v322, 7
    %v324 = vsub.s32 0, %v323
    %v325 = vrot.slane %v154, %v324
    %v326 = vlaneseq
    %v327 = vshrl.u32 %v326, 7
    %v328 = vsub.s32 1, %v327
    %v329 = vrot.slane %v154, %v328
    %332 = vmatprep.subr.bf16.mxu0 %v272
    %333 = vmatpush1.bf16.msra.mxu0 %v271
    %334 = vmatprep.subr.bf16.mxu0 %v270
    %335 = vmatpush1.bf16.msra.mxu0 %v269
    %336 = vmatprep.subr.bf16.mxu0 %v268
    %337 = vmatpush1.bf16.msra.mxu0 %v267
    %338 = vmatprep.subr.bf16.mxu0 %v266
    %339 = vmatpush1.bf16.msra.mxu0 %v265
    %340 = vmatprep.subr.bf16.mxu0 %v264
    %341 = vmatpush1.bf16.msra.mxu0 %v263
    %342 = vmatprep.subr.bf16.mxu0 %v262
    %343 = vmatpush1.bf16.msra.mxu0 %v261
    %344 = vmatprep.subr.bf16.mxu0 %v260
    %345 = vmatpush1.bf16.msra.mxu0 %v259
    %346 = vmatprep.subr.bf16.mxu0 %v258
    %347 = vmatpush1.bf16.msra.mxu0 %v257
    %348 = vmatprep.subr.bf16.mxu0 %v288
    %349 = vmatpush2.bf16.msra.mxu0 %v287
    %350 = vmatprep.subr.bf16.mxu0 %v286
    %351 = vmatpush2.bf16.msra.mxu0 %v285
    %352 = vmatprep.subr.bf16.mxu0 %v284
    %353 = vmatpush2.bf16.msra.mxu0 %v283
    %354 = vmatprep.subr.bf16.mxu0 %v282
    %355 = vmatpush2.bf16.msra.mxu0 %v281
    %356 = vmatprep.subr.bf16.mxu0 %v280
    %357 = vmatpush2.bf16.msra.mxu0 %v279
    %358 = vmatprep.subr.bf16.mxu0 %v278
    %359 = vmatpush2.bf16.msra.mxu0 %v277
    %360 = vmatprep.subr.bf16.mxu0 %v276
    %361 = vmatpush2.bf16.msra.mxu0 %v275
    %362 = vmatprep.subr.bf16.mxu0 %v274
    %363 = vmatpush2.bf16.msra.mxu0 %v273
    %364 = vmatprep.mubr.bf16.mxu0 %v160
    %365 = vmatmul.mubr.bf16.gmra.mxu0 %v159
    %v366 = vpop.f32.mrf.mxu0
    %v367 = vadd.f32 %v325, %v366
    %v368 = vpop.f32.mrf.mxu0
    %v369 = vadd.f32 %v329, %v368
    %v370 = vpop.f32.mrf.mxu0
    %v371 = vpop.f32.mrf.mxu0
    %372 = vdwg.mxu0
    %v373 = vxor.u32 %v367, 2147483648
    %v374 = vmul.f32 %v373, 1.442695
    %v375 = vpow.pop %v374
    %v376 = vadd.f32 %v375, 1.0
    %v377 = vrcp.pop %v376
    %v378 = vmul.f32 1.0, %v377
    %v379 = vxor.u32 %v369, 2147483648
    %v380 = vmul.f32 %v379, 1.442695
    %v381 = vpow.pop %v380
    %v382 = vadd.f32 %v381, 1.0
    %v383 = vrcp.pop %v382
    %v384 = vmul.f32 1.0, %v383
    %v401 = vunpack.c.l.b16 %v122
    %v402 = vunpack.c.l.b16 %v123
    %v403 = vunpack.c.l.b16 %v124
    %v404 = vunpack.c.l.b16 %v125
    %v405 = vunpack.c.l.b16 %v126
    %v406 = vunpack.c.l.b16 %v127
    %v407 = vunpack.c.l.b16 %v128
    %v408 = vunpack.c.l.b16 %v129
    %v409 = vunpack.c.l.b16 %v130
    %v410 = vunpack.c.l.b16 %v131
    %v411 = vunpack.c.l.b16 %v132
    %v412 = vunpack.c.l.b16 %v133
    %v413 = vunpack.c.l.b16 %v134
    %v414 = vunpack.c.l.b16 %v135
    %v415 = vunpack.c.l.b16 %v136
    %v416 = vunpack.c.l.b16 %v137
    %v417 = vpack.c.b16 %v402, %v401
    %v418 = vpack.c.b16 %v404, %v403
    %v419 = vpack.c.b16 %v406, %v405
    %v420 = vpack.c.b16 %v408, %v407
    %v421 = vpack.c.b16 %v410, %v409
    %v422 = vpack.c.b16 %v412, %v411
    %v423 = vpack.c.b16 %v414, %v413
    %v424 = vpack.c.b16 %v416, %v415
    %433 = vmatprep.subr.bf16.mxu0 0
    %434 = vmatpush1.bf16.msra.mxu0 %v424
    %435 = vmatprep.subr.bf16.mxu0 0
    %436 = vmatpush1.bf16.msra.mxu0 %v423
    %437 = vmatprep.subr.bf16.mxu0 0
    %438 = vmatpush1.bf16.msra.mxu0 %v422
    %439 = vmatprep.subr.bf16.mxu0 0
    %440 = vmatpush1.bf16.msra.mxu0 %v421
    %441 = vmatprep.subr.bf16.mxu0 0
    %442 = vmatpush1.bf16.msra.mxu0 %v420
    %443 = vmatprep.subr.bf16.mxu0 0
    %444 = vmatpush1.bf16.msra.mxu0 %v419
    %445 = vmatprep.subr.bf16.mxu0 0
    %446 = vmatpush1.bf16.msra.mxu0 %v418
    %447 = vmatprep.subr.bf16.mxu0 0
    %448 = vmatpush1.bf16.msra.mxu0 %v417
    %449 = vmatprep.subr.bf16.mxu0 0
    %450 = vmatpush2.bf16.msra.mxu0 0
    %451 = vmatprep.subr.bf16.mxu0 0
    %452 = vmatpush2.bf16.msra.mxu0 0
    %453 = vmatprep.subr.bf16.mxu0 0
    %454 = vmatpush2.bf16.msra.mxu0 0
    %455 = vmatprep.subr.bf16.mxu0 0
    %456 = vmatpush2.bf16.msra.mxu0 0
    %457 = vmatprep.subr.bf16.mxu0 0
    %458 = vmatpush2.bf16.msra.mxu0 0
    %459 = vmatprep.subr.bf16.mxu0 0
    %460 = vmatpush2.bf16.msra.mxu0 0
    %461 = vmatprep.subr.bf16.mxu0 0
    %462 = vmatpush2.bf16.msra.mxu0 0
    %463 = vmatprep.subr.bf16.mxu0 0
    %464 = vmatpush2.bf16.msra.mxu0 0
    %465 = vmatprep.mubr.bf16.mxu0 0
    %466 = vmatmul.mubr.bf16.gmra.mxu0 %v159
    %v467 = vpop.f32.mrf.mxu0
    %v468 = vadd.f32 %v155, %v467
    %v469 = vpop.f32.mrf.mxu0
    %v470 = vpop.f32.mrf.mxu0
    %v471 = vpop.f32.mrf.mxu0
    %472 = vdwg.mxu0
    %v489 = vunpack.c.l.b16 %v138
    %v490 = vunpack.c.l.b16 %v139
    %v491 = vunpack.c.l.b16 %v140
    %v492 = vunpack.c.l.b16 %v141
    %v493 = vunpack.c.l.b16 %v142
    %v494 = vunpack.c.l.b16 %v143
    %v495 = vunpack.c.l.b16 %v144
    %v496 = vunpack.c.l.b16 %v145
    %v497 = vunpack.c.l.b16 %v146
    %v498 = vunpack.c.l.b16 %v147
    %v499 = vunpack.c.l.b16 %v148
    %v500 = vunpack.c.l.b16 %v149
    %v501 = vunpack.c.l.b16 %v150
    %v502 = vunpack.c.l.b16 %v151
    %v503 = vunpack.c.l.b16 %v152
    %v504 = vunpack.c.l.b16 %v153
    %v505 = vpack.c.b16 %v490, %v489
    %v506 = vpack.c.b16 %v492, %v491
    %v507 = vpack.c.b16 %v494, %v493
    %v508 = vpack.c.b16 %v496, %v495
    %v509 = vpack.c.b16 %v498, %v497
    %v510 = vpack.c.b16 %v500, %v499
    %v511 = vpack.c.b16 %v502, %v501
    %v512 = vpack.c.b16 %v504, %v503
    %521 = vmatprep.subr.bf16.mxu0 0
    %522 = vmatpush1.bf16.msra.mxu0 %v512
    %523 = vmatprep.subr.bf16.mxu0 0
    %524 = vmatpush1.bf16.msra.mxu0 %v511
    %525 = vmatprep.subr.bf16.mxu0 0
    %526 = vmatpush1.bf16.msra.mxu0 %v510
    %527 = vmatprep.subr.bf16.mxu0 0
    %528 = vmatpush1.bf16.msra.mxu0 %v509
    %529 = vmatprep.subr.bf16.mxu0 0
    %530 = vmatpush1.bf16.msra.mxu0 %v508
    %531 = vmatprep.subr.bf16.mxu0 0
    %532 = vmatpush1.bf16.msra.mxu0 %v507
    %533 = vmatprep.subr.bf16.mxu0 0
    %534 = vmatpush1.bf16.msra.mxu0 %v506
    %535 = vmatprep.subr.bf16.mxu0 0
    %536 = vmatpush1.bf16.msra.mxu0 %v505
    %537 = vmatprep.subr.bf16.mxu0 0
    %538 = vmatpush2.bf16.msra.mxu0 0
    %539 = vmatprep.subr.bf16.mxu0 0
    %540 = vmatpush2.bf16.msra.mxu0 0
    %541 = vmatprep.subr.bf16.mxu0 0
    %542 = vmatpush2.bf16.msra.mxu0 0
    %543 = vmatprep.subr.bf16.mxu0 0
    %544 = vmatpush2.bf16.msra.mxu0 0
    %545 = vmatprep.subr.bf16.mxu0 0
    %546 = vmatpush2.bf16.msra.mxu0 0
    %547 = vmatprep.subr.bf16.mxu0 0
    %548 = vmatpush2.bf16.msra.mxu0 0
    %549 = vmatprep.subr.bf16.mxu0 0
    %550 = vmatpush2.bf16.msra.mxu0 0
    %551 = vmatprep.subr.bf16.mxu0 0
    %552 = vmatpush2.bf16.msra.mxu0 0
    %553 = vmatprep.mubr.bf16.mxu0 0
    %554 = vmatmul.mubr.bf16.gmra.mxu0 %v160
    %v555 = vpop.f32.mrf.mxu0
    %v556 = vadd.f32 %v156, %v555
    %v557 = vpop.f32.mrf.mxu0
    %v558 = vpop.f32.mrf.mxu0
    %v559 = vpop.f32.mrf.mxu0
    %560 = vdwg.mxu0
    %v561 = vmul.f32 %v378, %v556
    %v562 = vadd.f32 %v468, %v561
    %v563 = vtanh.pop %v562
    %v564 = vsub.f32 1.0, %v384
    %v565 = vmul.f32 %v564, %v563
    %v566 = vmul.f32 %v384, %v158
    %v567 = vadd.f32 %v565, %v566
    %v568 = vpack.c.bf16 %v567, %v567
    %569 = vmatprep.subr.bf16.mxu0 %v272
    %570 = vmatpush1.bf16.msra.mxu0 %v271
    %571 = vmatprep.subr.bf16.mxu0 %v270
    %572 = vmatpush1.bf16.msra.mxu0 %v269
    %573 = vmatprep.subr.bf16.mxu0 %v268
    %574 = vmatpush1.bf16.msra.mxu0 %v267
    %575 = vmatprep.subr.bf16.mxu0 %v266
    %576 = vmatpush1.bf16.msra.mxu0 %v265
    %577 = vmatprep.subr.bf16.mxu0 %v264
    %578 = vmatpush1.bf16.msra.mxu0 %v263
    %579 = vmatprep.subr.bf16.mxu0 %v262
    %580 = vmatpush1.bf16.msra.mxu0 %v261
    %581 = vmatprep.subr.bf16.mxu0 %v260
    %582 = vmatpush1.bf16.msra.mxu0 %v259
    %583 = vmatprep.subr.bf16.mxu0 %v258
    %584 = vmatpush1.bf16.msra.mxu0 %v257
    %585 = vmatprep.subr.bf16.mxu0 %v288
    %586 = vmatpush2.bf16.msra.mxu0 %v287
    %587 = vmatprep.subr.bf16.mxu0 %v286
    %588 = vmatpush2.bf16.msra.mxu0 %v285
    %589 = vmatprep.subr.bf16.mxu0 %v284
    %590 = vmatpush2.bf16.msra.mxu0 %v283
    %591 = vmatprep.subr.bf16.mxu0 %v282
    %592 = vmatpush2.bf16.msra.mxu0 %v281
    %593 = vmatprep.subr.bf16.mxu0 %v280
    %594 = vmatpush2.bf16.msra.mxu0 %v279
    %595 = vmatprep.subr.bf16.mxu0 %v278
    %596 = vmatpush2.bf16.msra.mxu0 %v277
    %597 = vmatprep.subr.bf16.mxu0 %v276
    %598 = vmatpush2.bf16.msra.mxu0 %v275
    %599 = vmatprep.subr.bf16.mxu0 %v274
    %600 = vmatpush2.bf16.msra.mxu0 %v273
    %601 = vmatprep.mubr.bf16.mxu0 %v568
    %602 = vmatmul.mubr.bf16.gmra.mxu0 %v568
    %v603 = vpop.f32.mrf.mxu0
    %v604 = vadd.f32 %v325, %v603
    %v605 = vpop.f32.mrf.mxu0
    %v606 = vadd.f32 %v329, %v605
    %v607 = vpop.f32.mrf.mxu0
    %v608 = vpop.f32.mrf.mxu0
    %609 = vdwg.mxu0
    %v610 = vxor.u32 %v604, 2147483648
    %v611 = vmul.f32 %v610, 1.442695
    %v612 = vpow.pop %v611
    %v613 = vadd.f32 %v612, 1.0
    %v614 = vrcp.pop %v613
    %v615 = vmul.f32 1.0, %v614
    %v616 = vxor.u32 %v606, 2147483648
    %v617 = vmul.f32 %v616, 1.442695
    %v618 = vpow.pop %v617
    %v619 = vadd.f32 %v618, 1.0
    %v620 = vrcp.pop %v619
    %v621 = vmul.f32 1.0, %v620
    %622 = vmatprep.subr.bf16.mxu0 0
    %623 = vmatpush1.bf16.msra.mxu0 %v424
    %624 = vmatprep.subr.bf16.mxu0 0
    %625 = vmatpush1.bf16.msra.mxu0 %v423
    %626 = vmatprep.subr.bf16.mxu0 0
    %627 = vmatpush1.bf16.msra.mxu0 %v422
    %628 = vmatprep.subr.bf16.mxu0 0
    %629 = vmatpush1.bf16.msra.mxu0 %v421
    %630 = vmatprep.subr.bf16.mxu0 0
    %631 = vmatpush1.bf16.msra.mxu0 %v420
    %632 = vmatprep.subr.bf16.mxu0 0
    %633 = vmatpush1.bf16.msra.mxu0 %v419
    %634 = vmatprep.subr.bf16.mxu0 0
    %635 = vmatpush1.bf16.msra.mxu0 %v418
    %636 = vmatprep.subr.bf16.mxu0 0
    %637 = vmatpush1.bf16.msra.mxu0 %v417
    %638 = vmatprep.subr.bf16.mxu0 0
    %639 = vmatpush2.bf16.msra.mxu0 0
    %640 = vmatprep.subr.bf16.mxu0 0
    %641 = vmatpush2.bf16.msra.mxu0 0
    %642 = vmatprep.subr.bf16.mxu0 0
    %643 = vmatpush2.bf16.msra.mxu0 0
    %644 = vmatprep.subr.bf16.mxu0 0
    %645 = vmatpush2.bf16.msra.mxu0 0
    %646 = vmatprep.subr.bf16.mxu0 0
    %647 = vmatpush2.bf16.msra.mxu0 0
    %648 = vmatprep.subr.bf16.mxu0 0
    %649 = vmatpush2.bf16.msra.mxu0 0
    %650 = vmatprep.subr.bf16.mxu0 0
    %651 = vmatpush2.bf16.msra.mxu0 0
    %652 = vmatprep.subr.bf16.mxu0 0
    %653 = vmatpush2.bf16.msra.mxu0 0
    %654 = vmatprep.mubr.bf16.mxu0 0
    %655 = vmatmul.mubr.bf16.gmra.mxu0 %v568
    %v656 = vpop.f32.mrf.mxu0
    %v657 = vadd.f32 %v155, %v656
    %v658 = vpop.f32.mrf.mxu0
    %v659 = vpop.f32.mrf.mxu0
    %v660 = vpop.f32.mrf.mxu0
    %661 = vdwg.mxu0
    %662 = vmatprep.subr.bf16.mxu0 0
    %663 = vmatpush1.bf16.msra.mxu0 %v512
    %664 = vmatprep.subr.bf16.mxu0 0
    %665 = vmatpush1.bf16.msra.mxu0 %v511
    %666 = vmatprep.subr.bf16.mxu0 0
    %667 = vmatpush1.bf16.msra.mxu0 %v510
    %668 = vmatprep.subr.bf16.mxu0 0
    %669 = vmatpush1.bf16.msra.mxu0 %v509
    %670 = vmatprep.subr.bf16.mxu0 0
    %671 = vmatpush1.bf16.msra.mxu0 %v508
    %672 = vmatprep.subr.bf16.mxu0 0
    %673 = vmatpush1.bf16.msra.mxu0 %v507
    %674 = vmatprep.subr.bf16.mxu0 0
    %675 = vmatpush1.bf16.msra.mxu0 %v506
    %676 = vmatprep.subr.bf16.mxu0 0
    %677 = vmatpush1.bf16.msra.mxu0 %v505
    %678 = vmatprep.subr.bf16.mxu0 0
    %679 = vmatpush2.bf16.msra.mxu0 0
    %680 = vmatprep.subr.bf16.mxu0 0
    %681 = vmatpush2.bf16.msra.mxu0 0
    %682 = vmatprep.subr.bf16.mxu0 0
    %683 = vmatpush2.bf16.msra.mxu0 0
    %684 = vmatprep.subr.bf16.mxu0 0
    %685 = vmatpush2.bf16.msra.mxu0 0
    %686 = vmatprep.subr.bf16.mxu0 0
    %687 = vmatpush2.bf16.msra.mxu0 0
    %688 = vmatprep.subr.bf16.mxu0 0
    %689 = vmatpush2.bf16.msra.mxu0 0
    %690 = vmatprep.subr.bf16.mxu0 0
    %691 = vmatpush2.bf16.msra.mxu0 0
    %692 = vmatprep.subr.bf16.mxu0 0
    %693 = vmatpush2.bf16.msra.mxu0 0
    %694 = vmatprep.mubr.bf16.mxu0 0
    %695 = vmatmul.mubr.bf16.gmra.mxu0 %v568
    %v696 = vpop.f32.mrf.mxu0
    %v697 = vadd.f32 %v156, %v696
    %v698 = vpop.f32.mrf.mxu0
    %v699 = vpop.f32.mrf.mxu0
    %v700 = vpop.f32.mrf.mxu0
    %701 = vdwg.mxu0
    %v702 = vmul.f32 %v615, %v697
    %v703 = vadd.f32 %v657, %v702
    %v704 = vtanh.pop %v703
    %v705 = vsub.f32 1.0, %v621
    %v706 = vmul.f32 %v705, %v704
    %v707 = vmul.f32 %v621, %v567
    %v708 = vadd.f32 %v706, %v707
    %709 = vst [vmem:[#allocation2] sm:$0x1] %v708
    %710 = vst [vmem:[#allocation11] sm:$0x1] %v708
    // Predicated region
    $region54: #{tpu_custom_call.1} parent=1 // pred_check
      _
    $region55: #{tpu_custom_call.1} parent=1 // pred_check_branch
      %712 = sbr.rel (0) target = $region57
    $region56: #{tpu_custom_call.1} parent=1 // pred_region
      %s714 = ssub.s32 16, 16
      %715 = vsyncadd [#allocation5], %s714
      %s717 = sshll.u32 [#allocation11], 4
      %s718 = int_to_ptr.vmem [resolvable:$true] %s717
      %720 = dma.vmem_to_hbm [thread:$0]  %s718, 16, %s8, [#allocation5]
    $region57: #{tpu_custom_call.1} parent=1 // pred_fallthru
      _
    // Predicated region
    $region58: #{tpu_custom_call.1} parent=1 // pred_check
      _
    $region59: #{tpu_custom_call.1} parent=1 // pred_check_branch
      %722 = sbr.rel (0) target = $region61
    $region60: #{tpu_custom_call.1} parent=1 // pred_region
      %723 = dma.done [#allocation5], 16
    $region61: #{tpu_custom_call.1} parent=1 // pred_fallthru
      _
    %724 = vsyncpa [#allocation4], 1
    %725 = vsyncpa [#allocation7], 1
    %726 = vsyncpa [#allocation10], 1
    %727 = vsyncpa [#allocation5], 1

</llo_original>
